<compile_context>
chip_gen: v7x
topology: tpu7x:2x2x1
jax: 0.10.0
libtpu: 0.0.40
codegen_flags: <defaults>
</compile_context>

<pallas_src>
import math
from functools import partial

import jax
import jax.numpy as jnp
from jax.experimental import pallas as pl
from jax.experimental.pallas import tpu as pltpu

_NEG_INF = -1e30
_VMEM_LIMIT = 48 * 1024 * 1024  # leaves headroom under v7x's 64 MiB physical VMEM


def _pick_tile(dim, preferred):
    """Largest preferred tile that evenly divides dim, else the full dim."""
    for t in preferred:
        if dim >= t and dim % t == 0:
            return t
    return dim


# --------------------------- tiled linear (MXU) ----------------------------

def _matmul_kernel(x_ref, w_ref, o_ref, acc_ref):
    @pl.when(pl.program_id(2) == 0)
    def _init():
        acc_ref[...] = jnp.zeros(acc_ref.shape, jnp.float32)

    acc_ref[...] += jnp.dot(x_ref[...], w_ref[...],
                            preferred_element_type=jnp.float32)

    @pl.when(pl.program_id(2) == pl.num_programs(2) - 1)
    def _store():
        o_ref[...] = acc_ref[...].astype(o_ref.dtype)


def linear(x2d, w_t):
    """y = x2d @ w_t, with w_t already in (in_features, out_features) layout."""
    M, K = x2d.shape
    _, N = w_t.shape
    tm = _pick_tile(M, (256, 128, 64, 32, 16, 8))
    tn = _pick_tile(N, (512, 256, 128))
    tk = _pick_tile(K, (512, 256, 128))
    grid = (M // tm, N // tn, K // tk)
    return pl.pallas_call(
        _matmul_kernel,
        out_shape=jax.ShapeDtypeStruct((M, N), x2d.dtype),
        grid=grid,
        in_specs=[pl.BlockSpec((tm, tk), lambda i, j, k: (i, k)),
                  pl.BlockSpec((tk, tn), lambda i, j, k: (k, j))],
        out_specs=pl.BlockSpec((tm, tn), lambda i, j, k: (i, j)),
        scratch_shapes=[pltpu.VMEM((tm, tn), jnp.float32)],
        compiler_params=pltpu.CompilerParams(
            dimension_semantics=("parallel", "parallel", "arbitrary"),
            vmem_limit_bytes=_VMEM_LIMIT),
    )(x2d, w_t)


# --------------------------------- RoPE ------------------------------------

def _rope_rotation_matrix(d):
    # x_rot = x @ R gives x_rot[2i] = -x[2i+1], x_rot[2i+1] = x[2i]
    r = jnp.zeros((d, d), jnp.float32)
    even = jnp.arange(0, d, 2)
    odd = even + 1
    r = r.at[odd, even].set(-1.0)
    r = r.at[even, odd].set(1.0)
    return r


def _rope_kernel(x_ref, cos_ref, sin_ref, rot_ref, o_ref):
    # x: (S, D); cos/sin: (S, D) interleaved (c0,c0,c1,c1,...)
    x = x_ref[0, 0].astype(jnp.float32)
    x_rot = jnp.dot(x, rot_ref[...], preferred_element_type=jnp.float32)
    out = x * cos_ref[...] + x_rot * sin_ref[...]
    o_ref[0, 0] = out.astype(o_ref.dtype)


def rope(x, cos_i, sin_i, rot):
    """x: (B, Hn, S, D); cos_i/sin_i: (S, D) interleaved; rot: (D, D)."""
    B, Hn, S, D = x.shape
    return pl.pallas_call(
        _rope_kernel,
        out_shape=jax.ShapeDtypeStruct(x.shape, x.dtype),
        grid=(B, Hn),
        in_specs=[pl.BlockSpec((1, 1, S, D), lambda b, h: (b, h, 0, 0)),
                  pl.BlockSpec((S, D), lambda b, h: (0, 0)),
                  pl.BlockSpec((S, D), lambda b, h: (0, 0)),
                  pl.BlockSpec((D, D), lambda b, h: (0, 0))],
        out_specs=pl.BlockSpec((1, 1, S, D), lambda b, h: (b, h, 0, 0)),
        compiler_params=pltpu.CompilerParams(
            dimension_semantics=("parallel", "parallel")),
    )(x, cos_i, sin_i, rot)


# --------------------------- flash attention --------------------------------

def _flash_attention_kernel(q_ref, k_ref, v_ref, o_ref,
                            m_ref, l_ref, acc_ref, *,
                            q_tile, kv_tile, kv_len, seq_len, start_pos, causal):
    kt = pl.program_id(3)

    @pl.when(kt == 0)
    def _init():
        m_ref[...] = jnp.full(m_ref.shape, _NEG_INF, jnp.float32)
        l_ref[...] = jnp.zeros(l_ref.shape, jnp.float32)
        acc_ref[...] = jnp.zeros(acc_ref.shape, jnp.float32)

    q = q_ref[0, 0]          # (tq, D) -- n_rep query heads folded into rows;
    k = k_ref[0, 0]          # (tk, D)    q already carries 1/sqrt(D) via wq
    v = v_ref[0, 0]          # (tk, D)

    s = jax.lax.dot_general(q, k, (((1,), (1,)), ((), ())),
                            preferred_element_type=jnp.float32)   # (tq, tk)

    if causal or (kv_len % kv_tile != 0):
        col = kt * kv_tile + jax.lax.broadcasted_iota(jnp.int32, s.shape, 1)
        if causal:
            # row r of this tile is query position start_pos + ((qt*tq + r) % S)
            row = (pl.program_id(2) * q_tile
                   + jax.lax.broadcasted_iota(jnp.int32, (q_tile, 1), 0))
            qpos = start_pos + row % seq_len                       # (tq, 1)
            valid = col <= qpos
        else:
            valid = col < kv_len
        s = jnp.where(valid, s, _NEG_INF)

    m_prev = m_ref[...]
    m_new = jnp.maximum(m_prev, jnp.max(s, axis=-1, keepdims=True))
    alpha = jnp.exp(m_prev - m_new)
    p = jnp.exp(s - m_new)
    l_ref[...] = alpha * l_ref[...] + jnp.sum(p, axis=-1, keepdims=True)
    acc_ref[...] = alpha * acc_ref[...] + jnp.dot(
        p.astype(v.dtype), v, preferred_element_type=jnp.float32)
    m_ref[...] = m_new

    @pl.when(kt == pl.num_programs(3) - 1)
    def _finalize():
        inv_l = pl.reciprocal(l_ref[...], approx=True)
        o_ref[0, 0] = (acc_ref[...] * inv_l).astype(o_ref.dtype)


def flash_attention(q, k, v, *, seq_len, start_pos, kv_len, causal):
    """q: (B, Hkv, R, D) with R = n_rep*S; k/v: (B, Hkv, T, D) native cache layout."""
    B, Hkv, R, D = q.shape
    T = k.shape[2]
    tq = _pick_tile(R, (256, 128, 64, 32, 16, 8))
    tk = _pick_tile(T, (512, 256, 128, 64, 32, 16, 8))
    grid = (B, Hkv, R // tq, pl.cdiv(T, tk))
    kernel = partial(_flash_attention_kernel, q_tile=tq, kv_tile=tk,
                     kv_len=kv_len, seq_len=seq_len, start_pos=start_pos,
                     causal=causal)
    return pl.pallas_call(
        kernel,
        out_shape=jax.ShapeDtypeStruct((B, Hkv, R, D), q.dtype),
        grid=grid,
        in_specs=[
            pl.BlockSpec((1, 1, tq, D), lambda b, h, qt, kt: (b, h, qt, 0)),
            pl.BlockSpec((1, 1, tk, D), lambda b, h, qt, kt: (b, h, kt, 0)),
            pl.BlockSpec((1, 1, tk, D), lambda b, h, qt, kt: (b, h, kt, 0)),
        ],
        out_specs=pl.BlockSpec((1, 1, tq, D), lambda b, h, qt, kt: (b, h, qt, 0)),
        scratch_shapes=[pltpu.VMEM((tq, 1), jnp.float32),
                        pltpu.VMEM((tq, 1), jnp.float32),
                        pltpu.VMEM((tq, D), jnp.float32)],
        compiler_params=pltpu.CompilerParams(
            dimension_semantics=("parallel", "parallel", "parallel", "arbitrary"),
            vmem_limit_bytes=_VMEM_LIMIT),
    )(q, k, v)


# ------------------------------- forward ------------------------------------

def precompute_cos_sin(head_dim, start_pos, seqlen, theta=10000.0):
    freqs = 1.0 / (theta ** (jnp.arange(0, head_dim, 2, dtype=jnp.float32) / head_dim))
    t = jnp.arange(start_pos, start_pos + seqlen, dtype=jnp.float32)
    ang = jnp.outer(t, freqs)                       # (S, head_dim // 2)
    return jnp.cos(ang), jnp.sin(ang)


def prepare_params(params, head_dim):
    """One-time layout plumbing: torch (out,in) -> (in,out), fold 1/sqrt(D) into
    wq (projection + RoPE are linear, so this is exact), and fuse q/k/v weights."""
    scale = 1.0 / math.sqrt(head_dim)
    wq_t = params["wq"].T * scale
    wk_t = params["wk"].T
    wv_t = params["wv"].T
    return {
        "wqkv": jnp.concatenate([wq_t, wk_t, wv_t], axis=1),
        "wo": params["wo"].T,
    }


def attention_forward(x, start_pos, cos, sin, mask, params_p, cache_k, cache_v,
                      n_heads, n_kv_heads):
    """params_p: output of prepare_params.
    cache_k/cache_v: (max_batch, n_kv_heads, max_seq, head_dim) — attention
    reads this layout natively (no per-step whole-cache transpose).
    start_pos must be a static Python int."""
    B, S, dim = x.shape
    head_dim = dim // n_heads
    n_rep = n_heads // n_kv_heads
    q_out = n_heads * head_dim
    kv_out = n_kv_heads * head_dim

    # fused QKV projection: one MXU kernel launch, x streamed once
    x2d = x.reshape(B * S, dim)
    qkv = linear(x2d, params_p["wqkv"])                       # (B*S, q_out + 2*kv_out)
    xq = qkv[:, :q_out].reshape(B, S, n_heads, head_dim)
    xk = qkv[:, q_out:q_out + kv_out].reshape(B, S, n_kv_heads, head_dim)
    xv = qkv[:, q_out + kv_out:].reshape(B, S, n_kv_heads, head_dim)

    # head-major layout (only the new S tokens are transposed, never the cache)
    xq = jnp.transpose(xq, (0, 2, 1, 3))      # (B, H,   S, D)
    xk = jnp.transpose(xk, (0, 2, 1, 3))      # (B, Hkv, S, D)
    xv = jnp.transpose(xv, (0, 2, 1, 3))      # (B, Hkv, S, D)

    # compact interleaved cos/sin: (S, D) with [c0,c0,c1,c1,...]
    cos_i = jnp.repeat(cos, 2, axis=-1).astype(jnp.float32)
    sin_i = jnp.repeat(sin, 2, axis=-1).astype(jnp.float32)
    rot = _rope_rotation_matrix(head_dim)

    xq = rope(xq, cos_i, sin_i, rot)   # 1/sqrt(D) already folded into wq
    xk = rope(xk, cos_i, sin_i, rot)

    # KV-cache update (functional).
    # TODO(synk): under jit with buffer donation this is in place; a Pallas
    # writeback using input_output_aliases would guarantee no full-cache copy.
    cache_k = jax.lax.dynamic_update_slice(
        cache_k, xk.astype(cache_k.dtype), (0, 0, start_pos, 0))
    cache_v = jax.lax.dynamic_update_slice(
        cache_v, xv.astype(cache_v.dtype), (0, 0, start_pos, 0))

    T = start_pos + S
    keys = cache_k[:B, :, :T].astype(xq.dtype)     # (B, Hkv, T, D)
    values = cache_v[:B, :, :T].astype(xq.dtype)   # (B, Hkv, T, D)

    # GQA: fold the n_rep query heads sharing a KV head into the row dimension.
    R = n_rep * S
    q = xq.reshape(B, n_kv_heads, R, head_dim)

    # TODO(synk): arbitrary additive masks are not supported by the fused
    # kernel; `mask is not None` selects the standard llama causal mask,
    # generated in-kernel from iota + static (start_pos, seqlen).
    out = flash_attention(q, keys, values, seq_len=S, start_pos=start_pos,
                          kv_len=T, causal=(mask is not None))   # (B, Hkv, R, D)

    out = out.reshape(B, n_kv_heads, n_rep, S, head_dim)
    out = jnp.transpose(out, (0, 3, 1, 2, 4)).reshape(B * S, n_heads * head_dim)
    y = linear(out, params_p["wo"]).reshape(B, S, dim)
    return y, cache_k, cache_v


# --------------------------- pure-JAX reference ----------------------------

def reference_forward(x, start_pos, cos, sin, mask, params, cache_k, cache_v,
                      n_heads, n_kv_heads):
    """Faithful port of the torch module; caches in torch (B, T, Hkv, D) layout."""
    B, S, dim = x.shape
    head_dim = dim // n_heads
    n_rep = n_heads // n_kv_heads
    hi = jax.lax.Precision.HIGHEST
    x2d = x.reshape(B * S, dim)
    xq = jnp.dot(x2d, params["wq"].T, precision=hi).reshape(B, S, n_heads, head_dim)
    xk = jnp.dot(x2d, params["wk"].T, precision=hi).reshape(B, S, n_kv_heads, head_dim)
    xv = jnp.dot(x2d, params["wv"].T, precision=hi).reshape(B, S, n_kv_heads, head_dim)

    def rope_ref(t):
        te = t[..., 0::2].astype(jnp.float32)
        to = t[..., 1::2].astype(jnp.float32)
        c = cos[None, :, None, :]
        s = sin[None, :, None, :]
        oe = te * c - to * s
        oo = te * s + to * c
        return jnp.stack([oe, oo], axis=-1).reshape(t.shape).astype(t.dtype)

    xq = rope_ref(xq)
    xk = rope_ref(xk)
    cache_k = jax.lax.dynamic_update_slice(cache_k, xk, (0, start_pos, 0, 0))
    cache_v = jax.lax.dynamic_update_slice(cache_v, xv, (0, start_pos, 0, 0))
    T = start_pos + S
    keys = jnp.repeat(cache_k[:B, :T], n_rep, axis=2)
    values = jnp.repeat(cache_v[:B, :T], n_rep, axis=2)
    q = jnp.transpose(xq, (0, 2, 1, 3))
    k = jnp.transpose(keys, (0, 2, 1, 3))
    v = jnp.transpose(values, (0, 2, 1, 3))
    scores = jnp.einsum("bhsd,bhtd->bhst", q, k, precision=hi) / math.sqrt(head_dim)
    if mask is not None:
        scores = scores + mask
    p = jax.nn.softmax(scores.astype(jnp.float32), axis=-1).astype(q.dtype)
    out = jnp.einsum("bhst,bhtd->bhsd", p, v, precision=hi)
    out2d = jnp.transpose(out, (0, 2, 1, 3)).reshape(B * S, n_heads * head_dim)
    y = jnp.dot(out2d, params["wo"].T, precision=hi).reshape(B, S, dim)
    return y, cache_k, cache_v


# ---------------------------------- main -----------------------------------

if __name__ == "__main__":
    key = jax.random.PRNGKey(0)
    B, S, dim = 2, 8, 32
    n_heads, n_kv_heads = 4, 2
    head_dim = dim // n_heads
    max_batch, max_seq = 2, 16

    k0, k1, k2, k3, k4, k5 = jax.random.split(key, 6)
    params = {
        "wq": 0.05 * jax.random.normal(k1, (n_heads * head_dim, dim), jnp.float32),
        "wk": 0.05 * jax.random.normal(k2, (n_kv_heads * head_dim, dim), jnp.float32),
        "wv": 0.05 * jax.random.normal(k3, (n_kv_heads * head_dim, dim), jnp.float32),
        "wo": 0.05 * jax.random.normal(k4, (dim, n_heads * head_dim), jnp.float32),
    }
    # One-time: transpose to (in,out), fold 1/sqrt(D) into wq, fuse QKV.
    params_p = prepare_params(params, head_dim)

    x1 = jax.random.normal(k0, (B, S, dim), jnp.float32)   # prefill tokens
    x2 = jax.random.normal(k5, (B, 1, dim), jnp.float32)   # one decode token

    # Pallas caches in (B, Hkv, maxT, D); reference caches in torch layout.
    cache_k = jnp.zeros((max_batch, n_kv_heads, max_seq, head_dim), jnp.float32)
    cache_v = jnp.zeros_like(cache_k)
    ref_ck = jnp.zeros((max_batch, max_seq, n_kv_heads, head_dim), jnp.float32)
    ref_cv = jnp.zeros_like(ref_ck)

    # ---- prefill: start_pos=0, causal mask (as built in llama) ----
    cos1, sin1 = precompute_cos_sin(head_dim, 0, S)
    mask1 = jnp.triu(jnp.full((S, S), float("-inf"), jnp.float32), k=1)

    y1, cache_k, cache_v = attention_forward(
        x1, 0, cos1, sin1, mask1, params_p, cache_k, cache_v,
        n_heads, n_kv_heads)
    jax.block_until_ready(y1)

    y1_ref, ref_ck, ref_cv = reference_forward(
        x1, 0, cos1, sin1, mask1, params, ref_ck, ref_cv, n_heads, n_kv_heads)
    err1 = float(jnp.max(jnp.abs(y1 - y1_ref)))
    assert jnp.allclose(y1, y1_ref, atol=5e-3, rtol=5e-3), f"prefill max abs err {err1}"

    # ---- single-token decode: start_pos=S, mask=None, reuses the KV cache ----
    cos2, sin2 = precompute_cos_sin(head_dim, S, 1)
    y2, cache_k, cache_v = attention_forward(
        x2, S, cos2, sin2, None, params_p, cache_k, cache_v,
        n_heads, n_kv_heads)
    jax.block_until_ready(y2)

    y2_ref, ref_ck, ref_cv = reference_forward(
        x2, S, cos2, sin2, None, params, ref_ck, ref_cv, n_heads, n_kv_heads)
    err2 = float(jnp.max(jnp.abs(y2 - y2_ref)))
    assert jnp.allclose(y2, y2_ref, atol=5e-3, rtol=5e-3), f"decode max abs err {err2}"

    print("KERNEL_OK")
</pallas_src>

<mosaic_0001>
module attributes {stable_mosaic.version = 11 : i64} {
  func.func @_matmul_kernel(%arg0: i32, %arg1: i32, %arg2: i32, %arg3: memref<16x32xf32, #tpu.memory_space<vmem>>, %arg4: memref<32x64xf32, #tpu.memory_space<vmem>>, %arg5: memref<16x64xf32, #tpu.memory_space<vmem>>, %arg6: memref<16x64xf32, #tpu.memory_space<vmem>>) attributes {dimension_semantics = [#tpu.dimension_semantics<parallel>, #tpu.dimension_semantics<parallel>, #tpu.dimension_semantics<arbitrary>], iteration_bounds = array<i64: 1, 1, 1>, scalar_prefetch = 0 : i64, scratch_operands = 1 : i64, tpu.core_type = #tpu.core_type<tc>, window_params = [{transform_indices = @transform_0, window_bounds = array<i64: 16, 32>}, {transform_indices = @transform_1, window_bounds = array<i64: 32, 64>}, {transform_indices = @transform_2, window_bounds = array<i64: 16, 64>}]} {
    %c0_i32 = arith.constant 0 : i32
    %0 = arith.cmpi eq, %arg2, %c0_i32 : i32
    %1 = arith.extui %0 : i1 to i32
    %c0_i32_0 = arith.constant 0 : i32
    %2 = arith.cmpi ne, %1, %c0_i32_0 : i32
    scf.if %2 {
      %cst_10 = arith.constant 0.000000e+00 : f32
      %12 = vector.broadcast %cst_10 : f32 to vector<16x64xf32>
      %c0_11 = arith.constant 0 : index
      %c0_12 = arith.constant 0 : index
      %13 = vector.load %arg6[%c0_11, %c0_12] : memref<16x64xf32, #tpu.memory_space<vmem>>, vector<16x64xf32>
      tpu.vector_store %arg6[%c0_11, %c0_12], %12 {strides = array<i32>} : memref<16x64xf32, #tpu.memory_space<vmem>>, vector<16x64xf32>,
    } else {
    }
    %c0 = arith.constant 0 : index
    %c0_1 = arith.constant 0 : index
    %3 = vector.load %arg6[%c0, %c0_1] : memref<16x64xf32, #tpu.memory_space<vmem>>, vector<16x64xf32>
    %c0_2 = arith.constant 0 : index
    %c0_3 = arith.constant 0 : index
    %4 = vector.load %arg3[%c0_2, %c0_3] : memref<16x32xf32, #tpu.memory_space<vmem>>, vector<16x32xf32>
    %c0_4 = arith.constant 0 : index
    %c0_5 = arith.constant 0 : index
    %5 = vector.load %arg4[%c0_4, %c0_5] : memref<32x64xf32, #tpu.memory_space<vmem>>, vector<32x64xf32>
    %cst = arith.constant dense<0.000000e+00> : vector<16x64xf32>
    %6 = tpu.matmul %4, %5, %cst {dimension_numbers = #tpu.dot_dimension_numbers<[1], [0], [0], [1], [0, 0, 1, 1], [], []>} : vector<16x32xf32>, vector<32x64xf32>, vector<16x64xf32> -> vector<16x64xf32>
    %7 = arith.addf %3, %6 : vector<16x64xf32>
    %c0_6 = arith.constant 0 : index
    %c0_7 = arith.constant 0 : index
    %8 = vector.load %arg6[%c0_6, %c0_7] : memref<16x64xf32, #tpu.memory_space<vmem>>, vector<16x64xf32>
    tpu.vector_store %arg6[%c0_6, %c0_7], %7 {strides = array<i32>} : memref<16x64xf32, #tpu.memory_space<vmem>>, vector<16x64xf32>,
    %c0_i32_8 = arith.constant 0 : i32
    %9 = arith.cmpi eq, %arg2, %c0_i32_8 : i32
    %10 = arith.extui %9 : i1 to i32
    %c0_i32_9 = arith.constant 0 : i32
    %11 = arith.cmpi ne, %10, %c0_i32_9 : i32
    scf.if %11 {
      %c0_10 = arith.constant 0 : index
      %c0_11 = arith.constant 0 : index
      %12 = vector.load %arg6[%c0_10, %c0_11] : memref<16x64xf32, #tpu.memory_space<vmem>>, vector<16x64xf32>
      %c0_12 = arith.constant 0 : index
      %c0_13 = arith.constant 0 : index
      %13 = vector.load %arg5[%c0_12, %c0_13] : memref<16x64xf32, #tpu.memory_space<vmem>>, vector<16x64xf32>
      tpu.vector_store %arg5[%c0_12, %c0_13], %12 {strides = array<i32>} : memref<16x64xf32, #tpu.memory_space<vmem>>, vector<16x64xf32>,
    } else {
    }
    return
  }
  func.func @transform_0(%arg0: i32, %arg1: i32, %arg2: i32) -> (i32, i32) {
    %c0_i32 = arith.constant 0 : i32
    return %arg0, %arg2 : i32, i32
  }
  func.func @transform_1(%arg0: i32, %arg1: i32, %arg2: i32) -> (i32, i32) {
    %c0_i32 = arith.constant 0 : i32
    return %arg2, %arg1 : i32, i32
  }
  func.func @transform_2(%arg0: i32, %arg1: i32, %arg2: i32) -> (i32, i32) {
    %c0_i32 = arith.constant 0 : i32
    return %arg0, %arg1 : i32, i32
  }
}

</mosaic_0001>

<llo_original>
// kernel: tpu_custom_call.1
$region0: #{tpu_custom_call.1}
  #allocation0 [shape = 'u32[]', space=smem, size = 0x4, offset = 0x4, fixed_abs, tag = 'smem constant byte address 0x4 - core index']
  #allocation1 [shape = 'u32[144,128]{1,0:T(1,128)}', space=vmem, size = 0x12000, scoped, tag = 'internal scratch']
  #allocation2 [shape = 'f32[16,64]{1,0:T(8,128)}', space=vmem, size = 0x2000, scoped, tag = 'scratch operand']
  %s0 = inlined_call_operand.hbm [shape: f32[16,32], index: 0, kind: input, shape index: {}]
  %s1 = inlined_call_operand.hbm [shape: f32[32,64], index: 1, kind: input, shape index: {}]
  %s2 = inlined_call_operand.hbm [shape: f32[16,64], index: 2, kind: output, shape index: {}]
  %s3 = sld [smem:[#allocation0]]
  $region34: #{tpu_custom_call.1} parent=0
    _
  %s5 = ssub.s32 1, %s3
  %s6 = scalar_select 0, %s5, %s3
  $region1: #{tpu_custom_call.1} parent=0
    #allocation3 [shape = 'u8[8192]{0}', space=vmem, size = 0x2000, scoped, tag = 'input window, operand 0, single buffered']
    #allocation4 [shape = 's32[1]{0}', space=sflag, size = 0x4, scoped, tag = 'scoped memory for tpu_custom_call.1']
    #allocation5 [shape = 's32[1]{0}', space=sflag, size = 0x4, scoped, tag = 'scoped memory for tpu_custom_call.1']
    #allocation6 [shape = 'u8[16384]{0}', space=vmem, size = 0x4000, scoped, tag = 'input window, operand 1, single buffered']
    #allocation7 [shape = 's32[1]{0}', space=sflag, size = 0x4, scoped, tag = 'scoped memory for tpu_custom_call.1']
    #allocation8 [shape = 'u8[8192]{0}', space=vmem, size = 0x2000, scoped, tag = 'output window, operand 0, single buffered']
    %7 = vsyncpa [#allocation4], 0
    %8 = vsyncpa [#allocation7], 0
    %9 = vsyncpa [#allocation5], 0
    // Predicated region
    $region2: #{tpu_custom_call.1} parent=1 // pred_check
      _
    $region3: #{tpu_custom_call.1} parent=1 // pred_check_branch
      %11 = sbr.rel (0) target = $region5
    $region4: #{tpu_custom_call.1} parent=1 // pred_region
      %s13 = ssub.s32 256, 256
      %14 = vsyncadd [#allocation4], %s13
      %s15 = sshll.u32 [#allocation3], 4
      %s16 = int_to_ptr.vmem [resolvable:$true] %s15
      %21 = dma.hbm_to_vmem [thread:$0]  %s0, 256, %s16, [#allocation4], 128, 128, 8
    $region5: #{tpu_custom_call.1} parent=1 // pred_fallthru
      _
    // Predicated region
    $region6: #{tpu_custom_call.1} parent=1 // pred_check
      _
    $region7: #{tpu_custom_call.1} parent=1 // pred_check_branch
      %23 = sbr.rel (0) target = $region9
    $region8: #{tpu_custom_call.1} parent=1 // pred_region
      %s25 = ssub.s32 512, 512
      %26 = vsyncadd [#allocation7], %s25
      %s27 = sshll.u32 [#allocation6], 4
      %s28 = int_to_ptr.vmem [resolvable:$true] %s27
      %33 = dma.hbm_to_vmem [thread:$0]  %s1, 512, %s28, [#allocation7], 128, 128, 8
    $region9: #{tpu_custom_call.1} parent=1 // pred_fallthru
      _
    // Predicated region
    $region10: #{tpu_custom_call.1} parent=1 // pred_check
      _
    $region11: #{tpu_custom_call.1} parent=1 // pred_check_branch
      %35 = sbr.rel (0) target = $region13
    $region12: #{tpu_custom_call.1} parent=1 // pred_region
      %36 = dma.done [#allocation4], 256
    $region13: #{tpu_custom_call.1} parent=1 // pred_fallthru
      _
    // Predicated region
    $region14: #{tpu_custom_call.1} parent=1 // pred_check
      _
    $region15: #{tpu_custom_call.1} parent=1 // pred_check_branch
      %38 = sbr.rel (0) target = $region17
    $region16: #{tpu_custom_call.1} parent=1 // pred_region
      %39 = dma.done [#allocation7], 512
    $region17: #{tpu_custom_call.1} parent=1 // pred_fallthru
      _
    %p40 = scmp.eq.s32.totalorder 0, 0
    // Predicated region
    $region18: #{tpu_custom_call.1} parent=1 // pred_check
      %p41 = pneg %p40
    $region19: #{tpu_custom_call.1} parent=1 // pred_check_branch
      %43 = sbr.rel (%p41) target = $region21
    $region20: #{tpu_custom_call.1} parent=1 // pred_region
      %vm44 = vcmask 523264
      %45 = vst.msk [vmem:[#allocation2] sm:$0xff] %vm44, 0.0
      %46 = vst.msk [vmem:[#allocation2 + $0x8] sm:$0xff] %vm44, 0.0
    $region21: #{tpu_custom_call.1} parent=1 // pred_fallthru
      _
    %v47 = vld [vmem:[#allocation2] sm:$0xff]
    %v48 = vld [vmem:[#allocation2 + $0x8] sm:$0xff]
    %v49 = vld [vmem:[#allocation3] sm:$0xff]
    %v50 = vld [vmem:[#allocation3 + $0x8] sm:$0xff]
    %v51 = vld [vmem:[#allocation6] sm:$0xff]
    %v52 = vld [vmem:[#allocation6 + $0x8] sm:$0xff]
    %v53 = vld [vmem:[#allocation6 + $0x10] sm:$0xff]
    %v54 = vld [vmem:[#allocation6 + $0x18] sm:$0xff]
    %vm55 = vcmask 261120
    %v57 = vsel %vm55, %v49, 0
    %v60 = vsel %vm55, %v50, 0
    %62 = vmatprep.subr.mxu0 0.0
    %63 = vmatpush1.msra.mxu0 %v51
    %64 = vmatprep.subr.mxu0 0.0
    %65 = vmatpush1.msra.mxu0 %v52
    %66 = vmatprep.subr.mxu0 0.0
    %67 = vmatpush1.msra.mxu0 %v53
    %68 = vmatprep.subr.mxu0 0.0
    %69 = vmatpush1.msra.mxu0 %v54
    %70 = vmatprep.subr.mxu0 0.0
    %71 = vmatpush1.msra.mxu0 0.0
    %72 = vmatprep.subr.mxu0 0.0
    %73 = vmatpush1.msra.mxu0 0.0
    %74 = vmatprep.subr.mxu0 0.0
    %75 = vmatpush1.msra.mxu0 0.0
    %76 = vmatprep.subr.mxu0 0.0
    %77 = vmatpush1.msra.mxu0 0.0
    %78 = vmatprep.subr.mxu0 0.0
    %79 = vmatpush1.msra.mxu0 0.0
    %80 = vmatprep.subr.mxu0 0.0
    %81 = vmatpush1.msra.mxu0 0.0
    %82 = vmatprep.subr.mxu0 0.0
    %83 = vmatpush1.msra.mxu0 0.0
    %84 = vmatprep.subr.mxu0 0.0
    %85 = vmatpush1.msra.mxu0 0.0
    %86 = vmatprep.subr.mxu0 0.0
    %87 = vmatpush1.msra.mxu0 0.0
    %88 = vmatprep.subr.mxu0 0.0
    %89 = vmatpush1.msra.mxu0 0.0
    %90 = vmatprep.subr.mxu0 0.0
    %91 = vmatpush1.msra.mxu0 0.0
    %92 = vmatprep.subr.mxu0 0.0
    %93 = vmatpush1.msra.mxu0 0.0
    %94 = vmatprep.subr.mxu0 0.0
    %95 = vmatpush1.msra.mxu0 0.0
    %96 = vmatprep.subr.mxu0 0.0
    %97 = vmatpush1.msra.mxu0 0.0
    %98 = vmatprep.subr.mxu0 0.0
    %99 = vmatpush1.msra.mxu0 0.0
    %100 = vmatprep.subr.mxu0 0.0
    %101 = vmatpush1.msra.mxu0 0.0
    %102 = vmatprep.subr.mxu0 0.0
    %103 = vmatpush1.msra.mxu0 0.0
    %104 = vmatprep.subr.mxu0 0.0
    %105 = vmatpush1.msra.mxu0 0.0
    %106 = vmatprep.subr.mxu0 0.0
    %107 = vmatpush1.msra.mxu0 0.0
    %108 = vmatprep.subr.mxu0 0.0
    %109 = vmatpush1.msra.mxu0 0.0
    %110 = vmatprep.subr.mxu0 0.0
    %111 = vmatpush1.msra.mxu0 0.0
    %112 = vmatprep.subr.mxu0 0.0
    %113 = vmatpush1.msra.mxu0 0.0
    %114 = vmatprep.subr.mxu0 0.0
    %115 = vmatpush1.msra.mxu0 0.0
    %116 = vmatprep.subr.mxu0 0.0
    %117 = vmatpush1.msra.mxu0 0.0
    %118 = vmatprep.subr.mxu0 0.0
    %119 = vmatpush1.msra.mxu0 0.0
    %120 = vmatprep.subr.mxu0 0.0
    %121 = vmatpush1.msra.mxu0 0.0
    %122 = vmatprep.subr.mxu0 0.0
    %123 = vmatpush1.msra.mxu0 0.0
    %124 = vmatprep.subr.mxu0 0.0
    %125 = vmatpush1.msra.mxu0 0.0
    %126 = vmatprep.mubr.f32.mxu0 0.0
    %127 = vmatmul.mubr.f32.gmra.mrb[0].mxu0 %v57
    %v128 = vpop.f32.mrb[0].mxu0
    %v129 = vadd.f32 0.0, %v128
    %v130 = vpop.f32.mrb[0].mxu0
    %131 = vmatprep.mubr.f32.mxu0 0.0
    %132 = vmatmul.mubr.f32.gmra.mrb[0].mxu0 %v60
    %v133 = vpop.f32.mrb[0].mxu0
    %v134 = vadd.f32 0.0, %v133
    %v135 = vpop.f32.mrb[0].mxu0
    %136 = vdwg.mxu0
    %v137 = vadd.f32 %v47, %v129
    %v138 = vadd.f32 %v48, %v134
    %vm139 = vcmask 523264
    %140 = vst.msk [vmem:[#allocation2] sm:$0xff] %vm139, %v137
    %141 = vst.msk [vmem:[#allocation2 + $0x8] sm:$0xff] %vm139, %v138
    // Predicated region
    $region22: #{tpu_custom_call.1} parent=1 // pred_check
      %p142 = pneg %p40
    $region23: #{tpu_custom_call.1} parent=1 // pred_check_branch
      %144 = sbr.rel (%p142) target = $region25
    $region24: #{tpu_custom_call.1} parent=1 // pred_region
      %v145 = vld [vmem:[#allocation2] sm:$0xff]
      %v146 = vld [vmem:[#allocation2 + $0x8] sm:$0xff]
      %147 = vst.msk [vmem:[#allocation8] sm:$0xff] %vm139, %v145
      %148 = vst.msk [vmem:[#allocation8 + $0x8] sm:$0xff] %vm139, %v146
    $region25: #{tpu_custom_call.1} parent=1 // pred_fallthru
      _
    // Predicated region
    $region26: #{tpu_custom_call.1} parent=1 // pred_check
      _
    $region27: #{tpu_custom_call.1} parent=1 // pred_check_branch
      %150 = sbr.rel (0) target = $region29
    $region28: #{tpu_custom_call.1} parent=1 // pred_region
      %s152 = ssub.s32 256, 256
      %153 = vsyncadd [#allocation5], %s152
      %s154 = sshll.u32 [#allocation8], 4
      %s155 = int_to_ptr.vmem [resolvable:$true] %s154
      %160 = dma.vmem_to_hbm [thread:$0]  %s155, 256, %s2, [#allocation5], 128, 128, 8
    $region29: #{tpu_custom_call.1} parent=1 // pred_fallthru
      _
    // Predicated region
    $region30: #{tpu_custom_call.1} parent=1 // pred_check
      _
    $region31: #{tpu_custom_call.1} parent=1 // pred_check_branch
      %162 = sbr.rel (0) target = $region33
    $region32: #{tpu_custom_call.1} parent=1 // pred_region
      %163 = dma.done [#allocation5], 256
    $region33: #{tpu_custom_call.1} parent=1 // pred_fallthru
      _
    %164 = vsyncpa [#allocation4], 1
    %165 = vsyncpa [#allocation7], 1
    %166 = vsyncpa [#allocation5], 1

</llo_original>
